<compile_context>
chip_gen: v7x
topology: tpu7x:2x2x1
jax: 0.10.0
libtpu: 0.0.40
codegen_flags: <defaults>
</compile_context>

<pallas_src>
import functools

import jax
import jax.numpy as jnp
from jax import lax
from jax.experimental import pallas as pl
from jax.experimental.pallas import tpu as pltpu

EPSILON = 1e-10


def _nce_kernel(f1_ref, f2_ref, tcol_ref, trow_ref, out_ref, *, temperature):
    f1 = f1_ref[...].astype(jnp.float32)          # (B, D)
    f2 = f2_ref[...].astype(jnp.float32)          # (B, D)

    # F.normalize(x, dim=1): x / clamp_min(||x||, 1e-12)
    # == x * rsqrt(max(||x||^2, 1e-24)); rsqrt lands on the EUP slot.
    inv1 = lax.rsqrt(jnp.maximum(jnp.sum(f1 * f1, axis=1, keepdims=True), 1e-24))
    inv2 = lax.rsqrt(jnp.maximum(jnp.sum(f2 * f2, axis=1, keepdims=True), 1e-24))
    f1n = f1 * inv1
    f2n = f2 * inv2

    # same/different-class masks via exact int32 broadcast compare.
    neg_mask = (tcol_ref[...] != trow_ref[...]).astype(jnp.float32)   # (B, B)
    pos_mask = 1.0 - neg_mask

    # cos[i,j] = 1 - 0.5 * ||f1n[i] - f2n[j]||^2 = f1n[i] · f2n[j]
    # (rows are unit-norm after normalization) -> one MXU matmul.
    cos = lax.dot_general(
        f1n, f2n,
        dimension_numbers=(((1,), (1,)), ((), ())),
        preferred_element_type=jnp.float32,
    )                                                                  # (B, B)

    # softmax over dim=1 (numerically stable), reciprocal-multiply normalization.
    logits = cos * jnp.float32(1.0 / temperature)
    m = jnp.max(logits, axis=1, keepdims=True)
    shifted = logits - m
    e = jnp.exp(shifted)
    sum_e = jnp.sum(e, axis=1, keepdims=True)                          # (B, 1)
    inv_sum = 1.0 / sum_e                                              # (B, 1)
    p = e * inv_sum                                                    # (B, B)

    # positive term via log-sum-exp: log p = shifted - log(sum_e)
    log_p = shifted - jnp.log(sum_e)
    log_pos = -log_p * pos_mask
    # negative term still needs p explicitly.
    log_neg = -jnp.log(1.0 - p + EPSILON) * neg_mask

    pos_cnt = jnp.sum(pos_mask, axis=1, keepdims=True)                 # (B, 1)
    neg_cnt = jnp.sum(neg_mask, axis=1, keepdims=True)                 # (B, 1)

    per_sample = (jnp.sum(log_pos, axis=1, keepdims=True) * (1.0 / pos_cnt)
                  + jnp.sum(log_neg, axis=1, keepdims=True) * (1.0 / neg_cnt))

    B = per_sample.shape[0]
    out_ref[0, 0] = jnp.sum(per_sample) * jnp.float32(1.0 / B)


def nce_loss_pallas(f1, f2, targets, temperature=1.0):
    B, D = f1.shape
    t = targets.astype(jnp.int32)
    tcol = t.reshape(B, 1)
    trow = t.reshape(1, B)

    kernel = functools.partial(_nce_kernel, temperature=float(temperature))
    out = pl.pallas_call(
        kernel,
        out_shape=jax.ShapeDtypeStruct((1, 1), jnp.float32),
        in_specs=[
            pl.BlockSpec(memory_space=pltpu.VMEM),   # f1  (B, D)
            pl.BlockSpec(memory_space=pltpu.VMEM),   # f2  (B, D)
            pl.BlockSpec(memory_space=pltpu.VMEM),   # targets column (B, 1) int32
            pl.BlockSpec(memory_space=pltpu.VMEM),   # targets row    (1, B) int32
        ],
        out_specs=pl.BlockSpec(memory_space=pltpu.SMEM),
    )(f1, f2, tcol, trow)
    return out[0, 0]


def nce_loss_ref(f1, f2, targets, temperature=1.0):
    # Pure-JAX mirror of the PyTorch forward (correctness check only).
    def normalize(x):
        n = jnp.sqrt(jnp.sum(x * x, axis=1, keepdims=True))
        return x / jnp.maximum(n, 1e-12)

    f1n = normalize(f1.astype(jnp.float32))
    f2n = normalize(f2.astype(jnp.float32))
    mask = targets[:, None] - targets[None, :]
    neg_mask = (mask != 0).astype(jnp.float32)
    dist = jnp.sum((f1n[:, None, :] - f2n[None, :, :]) ** 2, axis=2)
    cos = 1.0 - 0.5 * dist
    p = jax.nn.softmax(cos / temperature, axis=1)
    log_pos = -jnp.log(p + EPSILON) * (1.0 - neg_mask)
    log_neg = -jnp.log(1.0 - p + EPSILON) * neg_mask
    per = (jnp.sum(log_pos, axis=1) / jnp.sum(1.0 - neg_mask, axis=1)
           + jnp.sum(log_neg, axis=1) / jnp.sum(neg_mask, axis=1))
    return jnp.mean(per)


if __name__ == "__main__":
    B, D = 8, 32
    key = jax.random.PRNGKey(0)
    k1, k2 = jax.random.split(key)
    f1 = jax.random.normal(k1, (B, D), dtype=jnp.float32)
    f2 = jax.random.normal(k2, (B, D), dtype=jnp.float32)
    # deterministic labels guaranteeing every row has both positives & negatives
    targets = jnp.array([0, 0, 1, 1, 2, 2, 0, 1], dtype=jnp.int32)

    loss = nce_loss_pallas(f1, f2, targets, temperature=1.0)
    jax.block_until_ready(loss)

    ref = nce_loss_ref(f1, f2, targets, temperature=1.0)
    # slightly relaxed tolerance: rsqrt / matmul-reassociation / log-sum-exp
    # reformulation drift is ~1e-6 on a loss of O(1).
    assert jnp.allclose(loss, ref, atol=1e-4, rtol=1e-4), (loss, ref)

    print("KERNEL_OK")
</pallas_src>

<mosaic_0001>
module attributes {stable_mosaic.version = 11 : i64} {
  func.func @_nce_kernel(%arg0: memref<8x32xf32, #tpu.memory_space<vmem>>, %arg1: memref<8x32xf32, #tpu.memory_space<vmem>>, %arg2: memref<8x1xi32, #tpu.memory_space<vmem>>, %arg3: memref<1x8xi32, #tpu.memory_space<vmem>>, %arg4: memref<1x1xf32, #tpu.memory_space<smem>>) attributes {dimension_semantics = [], scalar_prefetch = 0 : i64, scratch_operands = 0 : i64, tpu.core_type = #tpu.core_type<tc>} {
    %c0 = arith.constant 0 : index
    %c0_0 = arith.constant 0 : index
    %0 = vector.load %arg0[%c0, %c0_0] : memref<8x32xf32, #tpu.memory_space<vmem>>, vector<8x32xf32>
    %c0_1 = arith.constant 0 : index
    %c0_2 = arith.constant 0 : index
    %1 = vector.load %arg1[%c0_1, %c0_2] : memref<8x32xf32, #tpu.memory_space<vmem>>, vector<8x32xf32>
    %2 = arith.mulf %0, %0 : vector<8x32xf32>
    %cst = arith.constant dense<0.000000e+00> : vector<8xf32>
    %3 = vector.multi_reduction <add>, %2, %cst [1] : vector<8x32xf32> to vector<8xf32>
    %4 = vector.shape_cast %3 : vector<8xf32> to vector<8x1xf32>
    %cst_3 = arith.constant 1.000000e-24 : f32
    %5 = vector.broadcast %cst_3 : f32 to vector<8x1xf32>
    %6 = arith.maximumf %4, %5 : vector<8x1xf32>
    %7 = math.rsqrt %6 : vector<8x1xf32>
    %8 = arith.mulf %1, %1 : vector<8x32xf32>
    %cst_4 = arith.constant dense<0.000000e+00> : vector<8xf32>
    %9 = vector.multi_reduction <add>, %8, %cst_4 [1] : vector<8x32xf32> to vector<8xf32>
    %10 = vector.shape_cast %9 : vector<8xf32> to vector<8x1xf32>
    %cst_5 = arith.constant 1.000000e-24 : f32
    %11 = vector.broadcast %cst_5 : f32 to vector<8x1xf32>
    %12 = arith.maximumf %10, %11 : vector<8x1xf32>
    %13 = math.rsqrt %12 : vector<8x1xf32>
    %14 = vector.broadcast %7 : vector<8x1xf32> to vector<8x32xf32>
    %15 = arith.mulf %0, %14 : vector<8x32xf32>
    %16 = vector.broadcast %13 : vector<8x1xf32> to vector<8x32xf32>
    %17 = arith.mulf %1, %16 : vector<8x32xf32>
    %c0_6 = arith.constant 0 : index
    %c0_7 = arith.constant 0 : index
    %18 = vector.load %arg2[%c0_6, %c0_7] : memref<8x1xi32, #tpu.memory_space<vmem>>, vector<8x1xi32>
    %c0_8 = arith.constant 0 : index
    %c0_9 = arith.constant 0 : index
    %19 = vector.load %arg3[%c0_8, %c0_9] : memref<1x8xi32, #tpu.memory_space<vmem>>, vector<1x8xi32>
    %20 = vector.broadcast %18 : vector<8x1xi32> to vector<8x8xi32>
    %21 = vector.broadcast %19 : vector<1x8xi32> to vector<8x8xi32>
    %22 = arith.cmpi ne, %20, %21 : vector<8x8xi32>
    %23 = arith.extui %22 : vector<8x8xi1> to vector<8x8xi32>
    %24 = arith.sitofp %23 : vector<8x8xi32> to vector<8x8xf32>
    %cst_10 = arith.constant 1.000000e+00 : f32
    %25 = vector.broadcast %cst_10 : f32 to vector<8x8xf32>
    %26 = arith.subf %25, %24 : vector<8x8xf32>
    %cst_11 = arith.constant dense<0.000000e+00> : vector<8x8xf32>
    %27 = tpu.matmul %15, %17, %cst_11 {dimension_numbers = #tpu.dot_dimension_numbers<[1], [1], [0], [0], [0, 0, 1, 0], [], []>} : vector<8x32xf32>, vector<8x32xf32>, vector<8x8xf32> -> vector<8x8xf32>
    %cst_12 = arith.constant 1.000000e+00 : f32
    %28 = vector.broadcast %cst_12 : f32 to vector<8x8xf32>
    %29 = arith.mulf %27, %28 : vector<8x8xf32>
    %cst_13 = arith.constant dense<0xFF800000> : vector<8xf32>
    %30 = vector.multi_reduction <maximumf>, %29, %cst_13 [1] : vector<8x8xf32> to vector<8xf32>
    %31 = vector.shape_cast %30 : vector<8xf32> to vector<8x1xf32>
    %32 = vector.broadcast %31 : vector<8x1xf32> to vector<8x8xf32>
    %33 = arith.subf %29, %32 : vector<8x8xf32>
    %34 = math.exp %33 : vector<8x8xf32>
    %cst_14 = arith.constant dense<0.000000e+00> : vector<8xf32>
    %35 = vector.multi_reduction <add>, %34, %cst_14 [1] : vector<8x8xf32> to vector<8xf32>
    %36 = vector.shape_cast %35 : vector<8xf32> to vector<8x1xf32>
    %cst_15 = arith.constant 1.000000e+00 : f32
    %37 = vector.broadcast %cst_15 : f32 to vector<8x1xf32>
    %38 = arith.divf %37, %36 : vector<8x1xf32>
    %39 = vector.broadcast %38 : vector<8x1xf32> to vector<8x8xf32>
    %40 = arith.mulf %34, %39 : vector<8x8xf32>
    %41 = math.log %36 : vector<8x1xf32>
    %42 = vector.broadcast %41 : vector<8x1xf32> to vector<8x8xf32>
    %43 = arith.subf %33, %42 : vector<8x8xf32>
    %cst_16 = arith.constant 0.000000e+00 : f32
    %44 = vector.broadcast %cst_16 : f32 to vector<8x8xf32>
    %45 = arith.subf %44, %43 : vector<8x8xf32>
    %46 = arith.mulf %45, %26 : vector<8x8xf32>
    %cst_17 = arith.constant 1.000000e+00 : f32
    %47 = vector.broadcast %cst_17 : f32 to vector<8x8xf32>
    %48 = arith.subf %47, %40 : vector<8x8xf32>
    %cst_18 = arith.constant 1.000000e-10 : f32
    %49 = vector.broadcast %cst_18 : f32 to vector<8x8xf32>
    %50 = arith.addf %48, %49 : vector<8x8xf32>
    %51 = math.log %50 : vector<8x8xf32>
    %cst_19 = arith.constant 0.000000e+00 : f32
    %52 = vector.broadcast %cst_19 : f32 to vector<8x8xf32>
    %53 = arith.subf %52, %51 : vector<8x8xf32>
    %54 = arith.mulf %53, %24 : vector<8x8xf32>
    %cst_20 = arith.constant dense<0.000000e+00> : vector<8xf32>
    %55 = vector.multi_reduction <add>, %26, %cst_20 [1] : vector<8x8xf32> to vector<8xf32>
    %56 = vector.shape_cast %55 : vector<8xf32> to vector<8x1xf32>
    %cst_21 = arith.constant dense<0.000000e+00> : vector<8xf32>
    %57 = vector.multi_reduction <add>, %24, %cst_21 [1] : vector<8x8xf32> to vector<8xf32>
    %58 = vector.shape_cast %57 : vector<8xf32> to vector<8x1xf32>
    %cst_22 = arith.constant dense<0.000000e+00> : vector<8xf32>
    %59 = vector.multi_reduction <add>, %46, %cst_22 [1] : vector<8x8xf32> to vector<8xf32>
    %60 = vector.shape_cast %59 : vector<8xf32> to vector<8x1xf32>
    %cst_23 = arith.constant 1.000000e+00 : f32
    %61 = vector.broadcast %cst_23 : f32 to vector<8x1xf32>
    %62 = arith.divf %61, %56 : vector<8x1xf32>
    %63 = arith.mulf %60, %62 : vector<8x1xf32>
    %cst_24 = arith.constant dense<0.000000e+00> : vector<8xf32>
    %64 = vector.multi_reduction <add>, %54, %cst_24 [1] : vector<8x8xf32> to vector<8xf32>
    %65 = vector.shape_cast %64 : vector<8xf32> to vector<8x1xf32>
    %cst_25 = arith.constant 1.000000e+00 : f32
    %66 = vector.broadcast %cst_25 : f32 to vector<8x1xf32>
    %67 = arith.divf %66, %58 : vector<8x1xf32>
    %68 = arith.mulf %65, %67 : vector<8x1xf32>
    %69 = arith.addf %63, %68 : vector<8x1xf32>
    %70 = vector.shape_cast %69 : vector<8x1xf32> to vector<1x8x1xf32>
    %cst_26 = arith.constant dense<0.000000e+00> : vector<1xf32>
    %71 = vector.multi_reduction <add>, %70, %cst_26 [1, 2] : vector<1x8x1xf32> to vector<1xf32>
    %72 = vector.shape_cast %71 : vector<1xf32> to vector<1x1x1xf32>
    %73 = vector.extract %72[0, 0, 0] : f32 from vector<1x1x1xf32>
    %cst_27 = arith.constant 1.250000e-01 : f32
    %74 = arith.mulf %73, %cst_27 : f32
    %c0_28 = arith.constant 0 : index
    %c0_29 = arith.constant 0 : index
    %75 = memref.load %arg4[%c0_28, %c0_29] : memref<1x1xf32, #tpu.memory_space<smem>>
    memref.store %74, %arg4[%c0_28, %c0_29] : memref<1x1xf32, #tpu.memory_space<smem>>
    return
  }
}

</mosaic_0001>

<llo_original>
// kernel: tpu_custom_call.1
$region0: #{tpu_custom_call.1}
  #allocation0 [shape = 'u32[]', space=smem, size = 0x4, offset = 0x4, fixed_abs, tag = 'smem constant byte address 0x4 - core index']
  #allocation1 [shape = 'u32[144,128]{1,0:T(1,128)}', space=vmem, size = 0x12000, scoped, tag = 'internal scratch']
  %s0 = inlined_call_operand.vmem [shape: f32[8,32], index: 0, kind: input, shape index: {}]
  %s1 = inlined_call_operand.hbm [shape: f32[8,32], index: 1, kind: input, shape index: {}]
  %s2 = inlined_call_operand.vmem [shape: s32[8,1], index: 2, kind: input, shape index: {}]
  %s3 = inlined_call_operand.vmem [shape: s32[1,8], index: 3, kind: input, shape index: {}]
  %s4 = inlined_call_operand.hbm [shape: f32[1,1], index: 4, kind: output, shape index: {}]
  %s5 = sld [smem:[#allocation0]]
  $region30: #{tpu_custom_call.1} parent=0
    _
  %s7 = ssub.s32 1, %s5
  %s8 = scalar_select 0, %s7, %s5
  $region1: #{tpu_custom_call.1} parent=0
    #allocation2 [shape = 'u8[4096]{0}', space=vmem, size = 0x1000, scoped, tag = 'input window, operand 1, single buffered']
    #allocation3 [shape = 's32[1]{0}', space=sflag, size = 0x4, scoped, tag = 'scoped memory for tpu_custom_call.1']
    #allocation4 [shape = 's32[1]{0}', space=sflag, size = 0x4, scoped, tag = 'scoped memory for tpu_custom_call.1']
    #allocation5 [shape = 'u8[512]{0}', space=smem, size = 0x200, scoped, tag = 'output window, operand 0, single buffered']
    %9 = vsyncpa [#allocation3], 0
    %10 = vsyncpa [#allocation4], 0
    // Predicated region
    $region2: #{tpu_custom_call.1} parent=1 // pred_check
      _
    $region3: #{tpu_custom_call.1} parent=1 // pred_check_branch
      %12 = sbr.rel (0) target = $region5
    $region4: #{tpu_custom_call.1} parent=1 // pred_region
      _
    $region5: #{tpu_custom_call.1} parent=1 // pred_fallthru
      _
    // Predicated region
    $region6: #{tpu_custom_call.1} parent=1 // pred_check
      _
    $region7: #{tpu_custom_call.1} parent=1 // pred_check_branch
      %14 = sbr.rel (0) target = $region9
    $region8: #{tpu_custom_call.1} parent=1 // pred_region
      %s16 = ssub.s32 128, 128
      %17 = vsyncadd [#allocation3], %s16
      %s19 = sshll.u32 [#allocation2], 4
      %s20 = int_to_ptr.vmem [resolvable:$true] %s19
      %22 = dma.hbm_to_vmem [thread:$0]  %s1, 128, %s20, [#allocation3]
    $region9: #{tpu_custom_call.1} parent=1 // pred_fallthru
      _
    // Predicated region
    $region10: #{tpu_custom_call.1} parent=1 // pred_check
      _
    $region11: #{tpu_custom_call.1} parent=1 // pred_check_branch
      %24 = sbr.rel (0) target = $region13
    $region12: #{tpu_custom_call.1} parent=1 // pred_region
      _
    $region13: #{tpu_custom_call.1} parent=1 // pred_fallthru
      _
    // Predicated region
    $region14: #{tpu_custom_call.1} parent=1 // pred_check
      _
    $region15: #{tpu_custom_call.1} parent=1 // pred_check_branch
      %26 = sbr.rel (0) target = $region17
    $region16: #{tpu_custom_call.1} parent=1 // pred_region
      _
    $region17: #{tpu_custom_call.1} parent=1 // pred_fallthru
      _
    // Predicated region
    $region18: #{tpu_custom_call.1} parent=1 // pred_check
      _
    $region19: #{tpu_custom_call.1} parent=1 // pred_check_branch
      %28 = sbr.rel (0) target = $region21
    $region20: #{tpu_custom_call.1} parent=1 // pred_region
      %29 = dma.done [#allocation3], 128
    $region21: #{tpu_custom_call.1} parent=1 // pred_fallthru
      _
    %v30 = vld [vmem:[%s0] sm:$0xff]
    %v31 = vld [vmem:[#allocation2] sm:$0xff]
    %v32 = vmul.f32 %v30, %v30
    %vm33 = vcmask 261120
    %v34 = vsel %vm33, %v32, 0.0
    %35 = vadd.xlane.f32.xlu0 %v34
    %v36 = vpop.xlane.xlu0 %35
    %v37 = vmax.f32 %v36, 1e-24
    %v38 = vrsqrt.pop %v37
    %v39 = vmul.f32 %v31, %v31
    %v40 = vsel %vm33, %v39, 0.0
    %41 = vadd.xlane.f32.xlu0 %v40
    %v42 = vpop.xlane.xlu0 %41
    %v43 = vmax.f32 %v42, 1e-24
    %v44 = vrsqrt.pop %v43
    %v45 = vmul.f32 %v30, %v38
    %v46 = vmul.f32 %v31, %v44
    %v47 = vld [vmem:[%s2] sm:$0xff]
    %v48 = vld [vmem:[%s3] sm:$0x1]
    %49 = vset.pattern.permute.xlu0 0
    %50 = vperm.xlu0 %49, %v47
    %v51 = vpop.permute.xlu0 %50
    %v52 = vlaneseq
    %v53 = vshrl.u32 %v52, 7
    %v54 = vsub.s32 0, %v53
    %v55 = vrot.slane %v48, %v54
    %vm56 = vcmp.ne.s32.totalorder %v51, %v55
    %v57 = vsel %vm56, 1, 0
    %v58 = vcvt.s32.f32 %v57
    %v59 = vsub.f32 1.0, %v58
    %v61 = vsel %vm33, %v45, 0
    %v64 = vsel %vm33, %v46, 0
    %66 = vmatprep.subr.mxu0 0.0
    %67 = vmatpush1.xpose.msra.mxu0 %v64
    %68 = vmatprep.subr.mxu0 0.0
    %69 = vmatpush1.xpose.msra.mxu0 0.0
    %70 = vmatprep.subr.mxu0 0.0
    %71 = vmatpush1.xpose.msra.mxu0 0.0
    %72 = vmatprep.subr.mxu0 0.0
    %73 = vmatpush1.xpose.msra.mxu0 0.0
    %74 = vmatprep.subr.mxu0 0.0
    %75 = vmatpush1.xpose.msra.mxu0 0.0
    %76 = vmatprep.subr.mxu0 0.0
    %77 = vmatpush1.xpose.msra.mxu0 0.0
    %78 = vmatprep.subr.mxu0 0.0
    %79 = vmatpush1.xpose.msra.mxu0 0.0
    %80 = vmatprep.subr.mxu0 0.0
    %81 = vmatpush1.xpose.msra.mxu0 0.0
    %82 = vmatprep.subr.mxu0 0.0
    %83 = vmatpush1.xpose.msra.mxu0 0.0
    %84 = vmatprep.subr.mxu0 0.0
    %85 = vmatpush1.xpose.msra.mxu0 0.0
    %86 = vmatprep.subr.mxu0 0.0
    %87 = vmatpush1.xpose.msra.mxu0 0.0
    %88 = vmatprep.subr.mxu0 0.0
    %89 = vmatpush1.xpose.msra.mxu0 0.0
    %90 = vmatprep.subr.mxu0 0.0
    %91 = vmatpush1.xpose.msra.mxu0 0.0
    %92 = vmatprep.subr.mxu0 0.0
    %93 = vmatpush1.xpose.msra.mxu0 0.0
    %94 = vmatprep.subr.mxu0 0.0
    %95 = vmatpush1.xpose.msra.mxu0 0.0
    %96 = vmatprep.subr.mxu0 0.0
    %97 = vmatpush1.xpose.msra.mxu0 0.0
    %98 = vmatprep.subr.mxu0 0.0
    %99 = vmatpush1.xpose.msra.mxu0 0.0
    %100 = vmatprep.subr.mxu0 0.0
    %101 = vmatpush1.xpose.msra.mxu0 0.0
    %102 = vmatprep.subr.mxu0 0.0
    %103 = vmatpush1.xpose.msra.mxu0 0.0
    %104 = vmatprep.subr.mxu0 0.0
    %105 = vmatpush1.xpose.msra.mxu0 0.0
    %106 = vmatprep.subr.mxu0 0.0
    %107 = vmatpush1.xpose.msra.mxu0 0.0
    %108 = vmatprep.subr.mxu0 0.0
    %109 = vmatpush1.xpose.msra.mxu0 0.0
    %110 = vmatprep.subr.mxu0 0.0
    %111 = vmatpush1.xpose.msra.mxu0 0.0
    %112 = vmatprep.subr.mxu0 0.0
    %113 = vmatpush1.xpose.msra.mxu0 0.0
    %114 = vmatprep.subr.mxu0 0.0
    %115 = vmatpush1.xpose.msra.mxu0 0.0
    %116 = vmatprep.subr.mxu0 0.0
    %117 = vmatpush1.xpose.msra.mxu0 0.0
    %118 = vmatprep.subr.mxu0 0.0
    %119 = vmatpush1.xpose.msra.mxu0 0.0
    %120 = vmatprep.subr.mxu0 0.0
    %121 = vmatpush1.xpose.msra.mxu0 0.0
    %122 = vmatprep.subr.mxu0 0.0
    %123 = vmatpush1.xpose.msra.mxu0 0.0
    %124 = vmatprep.subr.mxu0 0.0
    %125 = vmatpush1.xpose.msra.mxu0 0.0
    %126 = vmatprep.subr.mxu0 0.0
    %127 = vmatpush1.xpose.msra.mxu0 0.0
    %128 = vmatprep.subr.mxu0 0.0
    %129 = vmatpush1.xpose.msra.mxu0 0.0
    %130 = vmatprep.mubr.f32.mxu0 0.0
    %131 = vmatmul.mubr.f32.gmra.mrb[0].mxu0 %v61
    %v132 = vpop.f32.mrb[0].mxu0
    %v133 = vadd.f32 0.0, %v132
    %v134 = vpop.f32.mrb[0].mxu0
    %135 = vdwg.mxu0
    %vm136 = vcmask 64512
    %v137 = vsel %vm136, %v133, -inf
    %138 = vmax.xlane.f32.xlu0 %v137
    %v139 = vpop.xlane.xlu0 %138
    %v140 = vsub.f32 %v133, %v139
    %v141 = vmul.f32 %v140, 1.442695
    %v142 = vpow.pop %v141
    %v143 = vsel %vm136, %v142, 0.0
    %144 = vadd.xlane.f32.xlu0 %v143
    %v145 = vpop.xlane.xlu0 %144
    %v146 = vrcp.pop %v145
    %v147 = vmul.f32 1.0, %v146
    %v148 = vmul.f32 %v142, %v147
    %v149 = vlog2.pop %v145
    %v150 = vmul.f32 %v149, 0.6931472
    %v151 = vsub.f32 %v140, %v150
    %v152 = vsub.f32 0.0, %v151
    %v153 = vmul.f32 %v152, %v59
    %v154 = vsub.f32 1.0, %v148
    %v155 = vadd.f32 %v154, 1e-10
    %v156 = vlog2.pop %v155
    %v157 = vmul.f32 %v156, 0.6931472
    %v158 = vsub.f32 0.0, %v157
    %v159 = vmul.f32 %v158, %v58
    %v160 = vsel %vm136, %v59, 0.0
    %161 = vadd.xlane.f32.xlu0 %v160
    %v162 = vpop.xlane.xlu0 %161
    %v163 = vsel %vm136, %v58, 0.0
    %164 = vadd.xlane.f32.xlu0 %v163
    %v165 = vpop.xlane.xlu0 %164
    %v166 = vsel %vm136, %v153, 0.0
    %167 = vadd.xlane.f32.xlu0 %v166
    %v168 = vpop.xlane.xlu0 %167
    %v169 = vrcp.pop %v162
    %v170 = vmul.f32 1.0, %v169
    %v171 = vmul.f32 %v168, %v170
    %v172 = vsel %vm136, %v159, 0.0
    %173 = vadd.xlane.f32.xlu0 %v172
    %v174 = vpop.xlane.xlu0 %173
    %v175 = vrcp.pop %v165
    %v176 = vmul.f32 1.0, %v175
    %v177 = vmul.f32 %v174, %v176
    %v178 = vadd.f32 %v171, %v177
    %vm179 = vcmask 7168
    %v180 = vsel %vm179, %v178, 0.0
    %181 = vadd.xlane.f32.xlu0 %v180
    %v182 = vpop.xlane.xlu0 %181
    %v183 = vrot.slane %v182, 4
    %v184 = vadd.f32 %v182, %v183
    %v185 = vrot.slane %v184, 2
    %v186 = vadd.f32 %v184, %v185
    %v187 = vrot.slane %v186, 1
    %v188 = vadd.f32 %v186, %v187
    %s189 = vtos %v188
    %s190 = smul.f32 %s189, 0.125
    %s191 = scalar_lea.smem [#allocation5], 0
    %192 = sst [smem:[%s191]] %s190
    // Predicated region
    $region22: #{tpu_custom_call.1} parent=1 // pred_check
      _
    $region23: #{tpu_custom_call.1} parent=1 // pred_check_branch
      %194 = sbr.rel (0) target = $region25
    $region24: #{tpu_custom_call.1} parent=1 // pred_region
      %s196 = ssub.s32 16, 16
      %197 = vsyncadd [#allocation4], %s196
      %200 = dma.smem_to_hbm [#allocation5], 16, %s4, [#allocation4]
    $region25: #{tpu_custom_call.1} parent=1 // pred_fallthru
      _
    // Predicated region
    $region26: #{tpu_custom_call.1} parent=1 // pred_check
      _
    $region27: #{tpu_custom_call.1} parent=1 // pred_check_branch
      %202 = sbr.rel (0) target = $region29
    $region28: #{tpu_custom_call.1} parent=1 // pred_region
      %203 = dma.done [#allocation4], 16
    $region29: #{tpu_custom_call.1} parent=1 // pred_fallthru
      _
    %204 = sfence
    %205 = vsyncpa [#allocation3], 1
    %206 = vsyncpa [#allocation4], 1

</llo_original>
